<compile_context>
chip_gen: v7x
topology: tpu7x:2x2x1
jax: 0.10.0
libtpu: 0.0.40
codegen_flags: <defaults>
</compile_context>

<pallas_src>
import jax
import jax.numpy as jnp
from jax.experimental import pallas as pl
from jax.experimental.pallas import tpu as pltpu

EPS = 1e-5
_VMEM_LIMIT = 48 * 1024 * 1024  # explicit scoped-VMEM cap; fits v5e/v6e/v7x with headroom


def _round_up(x, m):
    return (x + m - 1) // m * m


def _pick_tile_n(n_rows, k, tile_d):
    """Largest row tile that keeps the double-buffered streams well inside VMEM."""
    try:
        vmem = pltpu.get_tpu_info().vmem_capacity_bytes  # 64 MiB/TC v7x, 128 MiB v5e/v6e
    except Exception:
        vmem = 64 * 1024 * 1024                          # conservative (v7x) fallback
    budget = min(vmem, _VMEM_LIMIT) // 4                 # headroom: resident weight + mosaic scratch
    per_row = 2 * (k * 2 + tile_d * 4)                   # double-buffered bf16 patches + f32 y
    tile = max(16, min(1024, budget // max(per_row, 1)))
    tile = (tile // 16) * 16                             # bf16 sublane-pack multiple
    return min(tile, _round_up(n_rows, 16))


# ---------------------------------------------------------------------------
# Kernels
# ---------------------------------------------------------------------------
def _embed_stats_kernel(p_ref, w_ref, y_ref, sum_ref, ssq_ref):
    # grid = (d_tiles, n_tiles); n (last, 'arbitrary') streams rows, d is channel-parallel.
    n = pl.program_id(1)
    y = jnp.dot(p_ref[...], w_ref[...], preferred_element_type=jnp.float32)  # MXU, f32 acc
    y_ref[...] = y

    @pl.when(n == 0)
    def _init():
        sum_ref[...] = jnp.zeros_like(sum_ref)
        ssq_ref[...] = jnp.zeros_like(ssq_ref)

    # Streaming per-channel BatchNorm statistics (cross-sublane reduce -> XLU slot).
    sum_ref[...] += jnp.sum(y, axis=0, keepdims=True)
    ssq_ref[...] += jnp.sum(y * y, axis=0, keepdims=True)


def _normalize_kernel(y_ref, scale_ref, shift_ref, out_ref):
    # Folded BN affine: out = y * scale + shift  (one FMA per element, lane-dense store).
    out_ref[...] = (y_ref[...] * scale_ref[...] + shift_ref[...]).astype(out_ref.dtype)


def _embed_affine_kernel(p_ref, w_ref, scale_ref, shift_ref, out_ref):
    # Eval-mode fused path (running stats known): matmul + folded BN affine in one pass.
    y = jnp.dot(p_ref[...], w_ref[...], preferred_element_type=jnp.float32)
    out_ref[...] = (y * scale_ref[...] + shift_ref[...]).astype(out_ref.dtype)


# ---------------------------------------------------------------------------
# Wrapper
# ---------------------------------------------------------------------------
def encoder_forward(x_nchw, conv_weight, gamma, beta, patch_size,
                    eps=EPS, running_stats=None, out_dtype=None):
    """ViT Encoder forward.

    x_nchw: (B, C, H, W); conv_weight: (D, C, ps, ps); gamma/beta: (D,).
    running_stats: optional (mean, var) of shape (D,) for eval-mode BatchNorm.
    Returns (B, P, D) with P = (H//ps) * (W//ps).
    """
    B, C, H, W = x_nchw.shape
    D = conv_weight.shape[0]
    ps = patch_size
    if H % ps or W % ps:
        raise ValueError("spatial size must be divisible by patch size")
    Hp, Wp = H // ps, W // ps
    P = Hp * Wp
    N = B * P
    K = C * ps * ps
    out_dtype = x_nchw.dtype if out_dtype is None else out_dtype

    # --- im2col: non-overlapping patches flattened in Conv2d's (C, kh, kw) order.
    #     allow_input_fusion below lets XLA fuse this reshape/transpose/cast/pad
    #     chain into the pallas_call input DMA (no separate HBM materialization).
    patches = x_nchw.reshape(B, C, Hp, ps, Wp, ps)
    patches = patches.transpose(0, 2, 4, 1, 3, 5).reshape(N, K)
    wt = conv_weight.reshape(D, K).T                                   # (K, D)

    # --- lane-dense padding + tile sizes.
    d_pad = _round_up(D, 128)
    tile_d = 256 if d_pad % 256 == 0 else 128    # 256 suits v6e/v7x MXU; 128 always valid (v5e)
    tile_n = _pick_tile_n(N, K, tile_d)
    n_pad = _round_up(N, tile_n)
    grid = (d_pad // tile_d, n_pad // tile_n)

    # Zero padding: padded rows / channels contribute exactly 0 to the BN sums.
    patches_p = jnp.pad(patches.astype(jnp.bfloat16), ((0, n_pad - N), (0, 0)))
    wt_p = jnp.pad(wt.astype(jnp.bfloat16), ((0, 0), (0, d_pad - D)))
    gamma_p = jnp.pad(gamma.astype(jnp.float32), (0, d_pad - D))
    beta_p = jnp.pad(beta.astype(jnp.float32), (0, d_pad - D))

    row_spec = pl.BlockSpec((tile_n, K), lambda d, n: (n, 0))          # streamed patch rows
    w_spec = pl.BlockSpec((K, tile_d), lambda d, n: (0, d))            # resident weight block
    yd_spec = pl.BlockSpec((tile_n, tile_d), lambda d, n: (n, d))      # lane-dense (N, Dp) tiles
    ch_spec = pl.BlockSpec((1, tile_d), lambda d, n: (0, d))           # per-channel vectors

    if running_stats is None:
        # ---- pass 1: patch-embed matmul + streaming BN statistics --------------
        y, ch_sum, ch_ssq = pl.pallas_call(
            _embed_stats_kernel,
            out_shape=(jax.ShapeDtypeStruct((n_pad, d_pad), jnp.float32),
                       jax.ShapeDtypeStruct((1, d_pad), jnp.float32),
                       jax.ShapeDtypeStruct((1, d_pad), jnp.float32)),
            grid=grid,
            in_specs=[row_spec, w_spec],
            out_specs=(yd_spec, ch_spec, ch_spec),
            compiler_params=pltpu.CompilerParams(
                dimension_semantics=("parallel", "arbitrary"),
                vmem_limit_bytes=_VMEM_LIMIT,
                allow_input_fusion=[True, False]),
        )(patches_p, wt_p)

        # ---- finalize stats on tiny (Dp,) vectors in plain JAX -----------------
        inv_n = 1.0 / float(N)                                   # 1/N precomputed on host
        mean = ch_sum[0] * inv_n
        var = jnp.maximum(ch_ssq[0] * inv_n - mean * mean, 0.0)  # biased var; clamp f32 cancellation
        scale = gamma_p * jax.lax.rsqrt(var + eps)
        shift = beta_p - mean * scale

        # ---- pass 2: lane-dense FMA epilogue out = y*scale + shift -------------
        out = pl.pallas_call(
            _normalize_kernel,
            out_shape=jax.ShapeDtypeStruct((n_pad, d_pad), out_dtype),
            grid=grid,
            in_specs=[yd_spec, ch_spec, ch_spec],
            out_specs=yd_spec,
            compiler_params=pltpu.CompilerParams(
                dimension_semantics=("parallel", "parallel"),
                vmem_limit_bytes=_VMEM_LIMIT),
        )(y, scale.reshape(1, d_pad), shift.reshape(1, d_pad))
    else:
        # ---- eval-mode BN (running stats): single fused matmul+affine pass -----
        r_mean, r_var = running_stats
        r_mean = jnp.pad(r_mean.astype(jnp.float32), (0, d_pad - D))
        r_var = jnp.pad(r_var.astype(jnp.float32), (0, d_pad - D), constant_values=1.0)
        scale = gamma_p * jax.lax.rsqrt(r_var + eps)
        shift = beta_p - r_mean * scale
        out = pl.pallas_call(
            _embed_affine_kernel,
            out_shape=jax.ShapeDtypeStruct((n_pad, d_pad), out_dtype),
            grid=grid,
            in_specs=[row_spec, w_spec, ch_spec, ch_spec],
            out_specs=yd_spec,
            compiler_params=pltpu.CompilerParams(
                dimension_semantics=("parallel", "parallel"),
                vmem_limit_bytes=_VMEM_LIMIT,
                allow_input_fusion=[True, False, False, False]),
        )(patches_p, wt_p, scale.reshape(1, d_pad), shift.reshape(1, d_pad))

    # Dropout is identity at inference.
    # TODO(synk): training-mode stochastic dropout not implemented.

    # (N, D) -> (B, P, D)   (== x.reshape(B, D, -1).permute(0, 2, 1))
    return out[:N, :D].reshape(B, P, D)


# ---------------------------------------------------------------------------
# Pure-JAX reference (f32, module semantics) for correctness checking
# ---------------------------------------------------------------------------
def _reference(x, conv_w, gamma, beta, ps, eps=EPS, running_stats=None):
    B, C, H, W = x.shape
    D = conv_w.shape[0]
    Hp, Wp = H // ps, W // ps
    patches = x.reshape(B, C, Hp, ps, Wp, ps).transpose(0, 2, 4, 1, 3, 5)
    patches = patches.reshape(B * Hp * Wp, -1)
    y = patches @ conv_w.reshape(D, -1).T
    if running_stats is None:
        mean = jnp.mean(y, axis=0)
        var = jnp.mean((y - mean) ** 2, axis=0)        # biased variance (BN forward)
    else:
        mean, var = running_stats
    out = (y - mean) * jax.lax.rsqrt(var + eps) * gamma + beta
    return out.reshape(B, Hp * Wp, D)


if __name__ == "__main__":
    # Small shapes consistent with the module: batch=2, channels=4, spatial=16,
    # patch_size=4, embed_dim=32.
    B, C_in, H, ps, D = 2, 4, 16, 4, 32

    key = jax.random.PRNGKey(0)
    kx, kw, kg, kb = jax.random.split(key, 4)
    x = jax.random.normal(kx, (B, C_in, H, H), dtype=jnp.float32)
    conv_w = jax.random.normal(kw, (D, C_in, ps, ps), dtype=jnp.float32) * 0.05
    gamma = 1.0 + 0.1 * jax.random.normal(kg, (D,), dtype=jnp.float32)
    beta = 0.1 * jax.random.normal(kb, (D,), dtype=jnp.float32)

    # Training-mode (batch statistics) path — matches a freshly constructed module.
    out = jax.block_until_ready(encoder_forward(x, conv_w, gamma, beta, ps))
    ref = _reference(x, conv_w, gamma, beta, ps)
    assert out.shape == (B, (H // ps) ** 2, D), out.shape
    # Tolerance covers bf16 matmul operands vs the f32 reference.
    assert jnp.allclose(out, ref, atol=3e-2, rtol=3e-2), "mismatch vs reference (train BN)"

    # Eval-mode (running statistics) path.
    r_mean = 0.1 * jax.random.normal(jax.random.PRNGKey(1), (D,), dtype=jnp.float32)
    r_var = 0.5 + jnp.abs(jax.random.normal(jax.random.PRNGKey(2), (D,), dtype=jnp.float32))
    out_e = jax.block_until_ready(
        encoder_forward(x, conv_w, gamma, beta, ps, running_stats=(r_mean, r_var)))
    ref_e = _reference(x, conv_w, gamma, beta, ps, running_stats=(r_mean, r_var))
    assert jnp.allclose(out_e, ref_e, atol=3e-2, rtol=3e-2), "mismatch vs reference (eval BN)"

    print("KERNEL_OK")
</pallas_src>

<mosaic_0001>
module attributes {stable_mosaic.version = 11 : i64} {
  func.func @_embed_stats_kernel(%arg0: i32, %arg1: i32, %arg2: memref<32x64xbf16, #tpu.memory_space<vmem>>, %arg3: memref<64x128xbf16, #tpu.memory_space<vmem>>, %arg4: memref<32x128xf32, #tpu.memory_space<vmem>>, %arg5: memref<1x128xf32, #tpu.memory_space<vmem>>, %arg6: memref<1x128xf32, #tpu.memory_space<vmem>>) attributes {dimension_semantics = [#tpu.dimension_semantics<parallel>, #tpu.dimension_semantics<arbitrary>], iteration_bounds = array<i64: 1, 1>, scalar_prefetch = 0 : i64, scratch_operands = 0 : i64, tpu.core_type = #tpu.core_type<tc>, window_params = [{transform_indices = @transform_0, window_bounds = array<i64: 32, 64>}, {transform_indices = @transform_1, window_bounds = array<i64: 64, 128>}, {transform_indices = @transform_2, window_bounds = array<i64: 32, 128>}, {transform_indices = @transform_3, window_bounds = array<i64: 1, 128>}, {transform_indices = @transform_4, window_bounds = array<i64: 1, 128>}]} {
    %c0 = arith.constant 0 : index
    %c0_0 = arith.constant 0 : index
    %0 = vector.load %arg2[%c0, %c0_0] : memref<32x64xbf16, #tpu.memory_space<vmem>>, vector<32x64xbf16>
    %c0_1 = arith.constant 0 : index
    %c0_2 = arith.constant 0 : index
    %1 = vector.load %arg3[%c0_1, %c0_2] : memref<64x128xbf16, #tpu.memory_space<vmem>>, vector<64x128xbf16>
    %cst = arith.constant dense<0.000000e+00> : vector<32x128xf32>
    %2 = tpu.matmul %0, %1, %cst {dimension_numbers = #tpu.dot_dimension_numbers<[1], [0], [0], [1], [0, 0, 1, 1], [], []>} : vector<32x64xbf16>, vector<64x128xbf16>, vector<32x128xf32> -> vector<32x128xf32>
    %c0_3 = arith.constant 0 : index
    %c0_4 = arith.constant 0 : index
    %3 = vector.load %arg4[%c0_3, %c0_4] : memref<32x128xf32, #tpu.memory_space<vmem>>, vector<32x128xf32>
    tpu.vector_store %arg4[%c0_3, %c0_4], %2 {strides = array<i32>} : memref<32x128xf32, #tpu.memory_space<vmem>>, vector<32x128xf32>,
    %c0_i32 = arith.constant 0 : i32
    %4 = arith.cmpi eq, %arg1, %c0_i32 : i32
    %5 = arith.extui %4 : i1 to i32
    %c0_i32_5 = arith.constant 0 : i32
    %6 = arith.cmpi ne, %5, %c0_i32_5 : i32
    scf.if %6 {
      %cst_16 = arith.constant 0.000000e+00 : f32
      %18 = vector.broadcast %cst_16 : f32 to vector<1x128xf32>
      %c0_17 = arith.constant 0 : index
      %c0_18 = arith.constant 0 : index
      %19 = vector.load %arg5[%c0_17, %c0_18] : memref<1x128xf32, #tpu.memory_space<vmem>>, vector<1x128xf32>
      tpu.vector_store %arg5[%c0_17, %c0_18], %18 {strides = array<i32>} : memref<1x128xf32, #tpu.memory_space<vmem>>, vector<1x128xf32>,
      %cst_19 = arith.constant 0.000000e+00 : f32
      %20 = vector.broadcast %cst_19 : f32 to vector<1x128xf32>
      %c0_20 = arith.constant 0 : index
      %c0_21 = arith.constant 0 : index
      %21 = vector.load %arg6[%c0_20, %c0_21] : memref<1x128xf32, #tpu.memory_space<vmem>>, vector<1x128xf32>
      tpu.vector_store %arg6[%c0_20, %c0_21], %20 {strides = array<i32>} : memref<1x128xf32, #tpu.memory_space<vmem>>, vector<1x128xf32>,
    } else {
    }
    %c0_6 = arith.constant 0 : index
    %c0_7 = arith.constant 0 : index
    %7 = vector.load %arg5[%c0_6, %c0_7] : memref<1x128xf32, #tpu.memory_space<vmem>>, vector<1x128xf32>
    %cst_8 = arith.constant dense<0.000000e+00> : vector<128xf32>
    %8 = vector.multi_reduction <add>, %2, %cst_8 [0] : vector<32x128xf32> to vector<128xf32>
    %9 = vector.shape_cast %8 : vector<128xf32> to vector<1x128xf32>
    %10 = arith.addf %7, %9 : vector<1x128xf32>
    %c0_9 = arith.constant 0 : index
    %c0_10 = arith.constant 0 : index
    %11 = vector.load %arg5[%c0_9, %c0_10] : memref<1x128xf32, #tpu.memory_space<vmem>>, vector<1x128xf32>
    tpu.vector_store %arg5[%c0_9, %c0_10], %10 {strides = array<i32>} : memref<1x128xf32, #tpu.memory_space<vmem>>, vector<1x128xf32>,
    %c0_11 = arith.constant 0 : index
    %c0_12 = arith.constant 0 : index
    %12 = vector.load %arg6[%c0_11, %c0_12] : memref<1x128xf32, #tpu.memory_space<vmem>>, vector<1x128xf32>
    %13 = arith.mulf %2, %2 : vector<32x128xf32>
    %cst_13 = arith.constant dense<0.000000e+00> : vector<128xf32>
    %14 = vector.multi_reduction <add>, %13, %cst_13 [0] : vector<32x128xf32> to vector<128xf32>
    %15 = vector.shape_cast %14 : vector<128xf32> to vector<1x128xf32>
    %16 = arith.addf %12, %15 : vector<1x128xf32>
    %c0_14 = arith.constant 0 : index
    %c0_15 = arith.constant 0 : index
    %17 = vector.load %arg6[%c0_14, %c0_15] : memref<1x128xf32, #tpu.memory_space<vmem>>, vector<1x128xf32>
    tpu.vector_store %arg6[%c0_14, %c0_15], %16 {strides = array<i32>} : memref<1x128xf32, #tpu.memory_space<vmem>>, vector<1x128xf32>,
    return
  }
  func.func @transform_0(%arg0: i32, %arg1: i32) -> (i32, i32) {
    %c0_i32 = arith.constant 0 : i32
    %c0_i32_0 = arith.constant 0 : i32
    return %arg1, %c0_i32 : i32, i32
  }
  func.func @transform_1(%arg0: i32, %arg1: i32) -> (i32, i32) {
    %c0_i32 = arith.constant 0 : i32
    %c0_i32_0 = arith.constant 0 : i32
    return %c0_i32, %arg0 : i32, i32
  }
  func.func @transform_2(%arg0: i32, %arg1: i32) -> (i32, i32) {
    %c0_i32 = arith.constant 0 : i32
    return %arg1, %arg0 : i32, i32
  }
  func.func @transform_3(%arg0: i32, %arg1: i32) -> (i32, i32) {
    %c0_i32 = arith.constant 0 : i32
    %c0_i32_0 = arith.constant 0 : i32
    return %c0_i32, %arg0 : i32, i32
  }
  func.func @transform_4(%arg0: i32, %arg1: i32) -> (i32, i32) {
    %c0_i32 = arith.constant 0 : i32
    %c0_i32_0 = arith.constant 0 : i32
    return %c0_i32, %arg0 : i32, i32
  }
}

</mosaic_0001>

<llo_original>
// kernel: tpu_custom_call.1
$region0: #{tpu_custom_call.1}
  #allocation0 [shape = 'u32[]', space=smem, size = 0x4, offset = 0x4, fixed_abs, tag = 'smem constant byte address 0x4 - core index']
  #allocation1 [shape = 'u32[144,128]{1,0:T(1,128)}', space=vmem, size = 0x12000, scoped, tag = 'internal scratch']
  %s0 = inlined_call_operand.hbm [shape: bf16[32,64], index: 0, kind: input, shape index: {}]
  %s1 = inlined_call_operand.hbm [shape: bf16[64,128], index: 1, kind: input, shape index: {}]
  %s2 = inlined_call_operand.hbm [shape: f32[32,128], index: 2, kind: output, shape index: {0}]
  %s3 = inlined_call_operand.hbm [shape: f32[1,128], index: 3, kind: output, shape index: {1}]
  %s4 = inlined_call_operand.hbm [shape: f32[1,128], index: 4, kind: output, shape index: {2}]
  %5 = xla_tuple %s2, %s3, %s4
  %s6 = sld [smem:[#allocation0]]
  $region46: #{tpu_custom_call.1} parent=0
    _
  %s8 = ssub.s32 1, %s6
  %s9 = scalar_select 0, %s8, %s6
  $region1: #{tpu_custom_call.1} parent=0
    #allocation2 [shape = 'u8[8192]{0}', space=vmem, size = 0x2000, scoped, tag = 'input window, operand 0, single buffered']
    #allocation3 [shape = 's32[1]{0}', space=sflag, size = 0x4, scoped, tag = 'scoped memory for tpu_custom_call.1']
    #allocation4 [shape = 's32[1]{0}', space=sflag, size = 0x4, scoped, tag = 'scoped memory for tpu_custom_call.1']
    #allocation5 [shape = 'u8[16384]{0}', space=vmem, size = 0x4000, scoped, tag = 'input window, operand 1, single buffered']
    #allocation6 [shape = 's32[1]{0}', space=sflag, size = 0x4, scoped, tag = 'scoped memory for tpu_custom_call.1']
    #allocation7 [shape = 'u8[16384]{0}', space=vmem, size = 0x4000, scoped, tag = 'output window, operand 0, single buffered']
    #allocation8 [shape = 'u8[512]{0}', space=vmem, size = 0x400, scoped, tag = 'output window, operand 1, single buffered']
    #allocation9 [shape = 's32[1]{0}', space=sflag, size = 0x4, scoped, tag = 'scoped memory for tpu_custom_call.1']
    #allocation10 [shape = 'u8[512]{0}', space=vmem, size = 0x400, scoped, tag = 'output window, operand 2, single buffered']
    %10 = vsyncpa [#allocation3], 0
    %11 = vsyncpa [#allocation6], 0
    %12 = vsyncpa [#allocation4], 0
    %13 = vsyncpa [#allocation9], 0
    // Predicated region
    $region2: #{tpu_custom_call.1} parent=1 // pred_check
      _
    $region3: #{tpu_custom_call.1} parent=1 // pred_check_branch
      %15 = sbr.rel (0) target = $region5
    $region4: #{tpu_custom_call.1} parent=1 // pred_region
      %s17 = ssub.s32 256, 256
      %18 = vsyncadd [#allocation3], %s17
      %s19 = sshll.u32 [#allocation2], 4
      %s20 = int_to_ptr.vmem [resolvable:$true] %s19
      %25 = dma.hbm_to_vmem [thread:$0]  %s0, 256, %s20, [#allocation3], 64, 64, 4
    $region5: #{tpu_custom_call.1} parent=1 // pred_fallthru
      _
    // Predicated region
    $region6: #{tpu_custom_call.1} parent=1 // pred_check
      _
    $region7: #{tpu_custom_call.1} parent=1 // pred_check_branch
      %27 = sbr.rel (0) target = $region9
    $region8: #{tpu_custom_call.1} parent=1 // pred_region
      %s29 = ssub.s32 512, 512
      %30 = vsyncadd [#allocation6], %s29
      %s31 = sshll.u32 [#allocation5], 4
      %s32 = int_to_ptr.vmem [resolvable:$true] %s31
      %37 = dma.hbm_to_vmem [thread:$0]  %s1, 512, %s32, [#allocation6], 64, 64, 4
    $region9: #{tpu_custom_call.1} parent=1 // pred_fallthru
      _
    // Predicated region
    $region10: #{tpu_custom_call.1} parent=1 // pred_check
      _
    $region11: #{tpu_custom_call.1} parent=1 // pred_check_branch
      %39 = sbr.rel (0) target = $region13
    $region12: #{tpu_custom_call.1} parent=1 // pred_region
      %40 = dma.done [#allocation3], 256
    $region13: #{tpu_custom_call.1} parent=1 // pred_fallthru
      _
    // Predicated region
    $region14: #{tpu_custom_call.1} parent=1 // pred_check
      _
    $region15: #{tpu_custom_call.1} parent=1 // pred_check_branch
      %42 = sbr.rel (0) target = $region17
    $region16: #{tpu_custom_call.1} parent=1 // pred_region
      %43 = dma.done [#allocation6], 512
    $region17: #{tpu_custom_call.1} parent=1 // pred_fallthru
      _
    %v45 = vld [vmem:[#allocation2] sm:$0xf]
    %v46 = vld [vmem:[#allocation2 + $0x4] sm:$0xf]
    %v47 = vld [vmem:[#allocation2 + $0x8] sm:$0xf]
    %v48 = vld [vmem:[#allocation2 + $0xc] sm:$0xf]
    %v49 = vld [vmem:[#allocation5] sm:$0xf]
    %v50 = vld [vmem:[#allocation5 + $0x4] sm:$0xf]
    %v51 = vld [vmem:[#allocation5 + $0x8] sm:$0xf]
    %v52 = vld [vmem:[#allocation5 + $0xc] sm:$0xf]
    %v53 = vld [vmem:[#allocation5 + $0x10] sm:$0xf]
    %v54 = vld [vmem:[#allocation5 + $0x14] sm:$0xf]
    %v55 = vld [vmem:[#allocation5 + $0x18] sm:$0xf]
    %v56 = vld [vmem:[#allocation5 + $0x1c] sm:$0xf]
    %v61 = vunpack.c.l.b16 %v45
    %v62 = vunpack.c.l.b16 %v46
    %v63 = vunpack.c.l.b16 %v47
    %v64 = vunpack.c.l.b16 %v48
    %v65 = vpack.c.b16 %v62, %v61
    %v66 = vpack.c.b16 %v64, %v63
    %v75 = vunpack.c.l.b16 %v49
    %v76 = vunpack.c.l.b16 %v50
    %v77 = vunpack.c.l.b16 %v51
    %v78 = vunpack.c.l.b16 %v52
    %v79 = vunpack.c.l.b16 %v53
    %v80 = vunpack.c.l.b16 %v54
    %v81 = vunpack.c.l.b16 %v55
    %v82 = vunpack.c.l.b16 %v56
    %v83 = vpack.c.b16 %v76, %v75
    %v84 = vpack.c.b16 %v78, %v77
    %v85 = vpack.c.b16 %v80, %v79
    %v86 = vpack.c.b16 %v82, %v81
    %vm91 = vcmask 523264
    %v93 = vsel %vm91, %v65, 0
    %v96 = vsel %vm91, %v66, 0
    %98 = vmatprep.subr.bf16.mxu0 0
    %99 = vmatpush1.bf16.msra.mxu0 %v83
    %100 = vmatprep.subr.bf16.mxu0 0
    %101 = vmatpush1.bf16.msra.mxu0 %v84
    %102 = vmatprep.subr.bf16.mxu0 0
    %103 = vmatpush1.bf16.msra.mxu0 %v85
    %104 = vmatprep.subr.bf16.mxu0 0
    %105 = vmatpush1.bf16.msra.mxu0 %v86
    %106 = vmatprep.subr.bf16.mxu0 0
    %107 = vmatpush1.bf16.msra.mxu0 0
    %108 = vmatprep.subr.bf16.mxu0 0
    %109 = vmatpush1.bf16.msra.mxu0 0
    %110 = vmatprep.subr.bf16.mxu0 0
    %111 = vmatpush1.bf16.msra.mxu0 0
    %112 = vmatprep.subr.bf16.mxu0 0
    %113 = vmatpush1.bf16.msra.mxu0 0
    %114 = vmatprep.subr.bf16.mxu0 0
    %115 = vmatpush1.bf16.msra.mxu0 0
    %116 = vmatprep.subr.bf16.mxu0 0
    %117 = vmatpush1.bf16.msra.mxu0 0
    %118 = vmatprep.subr.bf16.mxu0 0
    %119 = vmatpush1.bf16.msra.mxu0 0
    %120 = vmatprep.subr.bf16.mxu0 0
    %121 = vmatpush1.bf16.msra.mxu0 0
    %122 = vmatprep.subr.bf16.mxu0 0
    %123 = vmatpush1.bf16.msra.mxu0 0
    %124 = vmatprep.subr.bf16.mxu0 0
    %125 = vmatpush1.bf16.msra.mxu0 0
    %126 = vmatprep.subr.bf16.mxu0 0
    %127 = vmatpush1.bf16.msra.mxu0 0
    %128 = vmatprep.subr.bf16.mxu0 0
    %129 = vmatpush1.bf16.msra.mxu0 0
    %130 = vmatprep.mubr.bf16.mxu0 0
    %131 = vmatmul.mubr.bf16.gmra.mrb[0].mxu0 %v93
    %v132 = vpop.f32.mrb[0].mxu0
    %v133 = vadd.f32 0.0, %v132
    %v134 = vpop.f32.mrb[0].mxu0
    %v135 = vpop.f32.mrb[0].mxu0
    %v136 = vadd.f32 0.0, %v135
    %v137 = vpop.f32.mrb[0].mxu0
    %138 = vmatprep.mubr.bf16.mxu0 0
    %139 = vmatmul.mubr.bf16.gmra.mrb[0].mxu0 %v96
    %v140 = vpop.f32.mrb[0].mxu0
    %v141 = vadd.f32 0.0, %v140
    %v142 = vpop.f32.mrb[0].mxu0
    %v143 = vpop.f32.mrb[0].mxu0
    %v144 = vadd.f32 0.0, %v143
    %v145 = vpop.f32.mrb[0].mxu0
    %146 = vdwg.mxu0
    %147 = vst [vmem:[#allocation7] sm:$0xff] %v133
    %148 = vst [vmem:[#allocation7 + $0x8] sm:$0xff] %v136
    %149 = vst [vmem:[#allocation7 + $0x10] sm:$0xff] %v141
    %150 = vst [vmem:[#allocation7 + $0x18] sm:$0xff] %v144
    %p151 = scmp.eq.s32.totalorder 0, 0
    // Predicated region
    $region18: #{tpu_custom_call.1} parent=1 // pred_check
      %p152 = pneg %p151
    $region19: #{tpu_custom_call.1} parent=1 // pred_check_branch
      %154 = sbr.rel (%p152) target = $region21
    $region20: #{tpu_custom_call.1} parent=1 // pred_region
      %155 = vst [vmem:[#allocation8] sm:$0x1] 0.0
      %156 = vst [vmem:[#allocation10] sm:$0x1] 0.0
    $region21: #{tpu_custom_call.1} parent=1 // pred_fallthru
      _
    %v157 = vld [vmem:[#allocation8] sm:$0x1]
    %v158 = vadd.f32 %v133, %v136
    %v159 = vadd.f32 %v158, %v141
    %v160 = vadd.f32 %v159, %v144
    %v161 = vrot.slane %v160, 4
    %v162 = vadd.f32 %v160, %v161
    %v163 = vrot.slane %v162, 2
    %v164 = vadd.f32 %v162, %v163
    %v165 = vrot.slane %v164, 1
    %v166 = vadd.f32 %v164, %v165
    %v167 = vadd.f32 %v157, %v166
    %168 = vst [vmem:[#allocation8] sm:$0x1] %v167
    %v169 = vld [vmem:[#allocation10] sm:$0x1]
    %v170 = vmul.f32 %v133, %v133
    %v171 = vmul.f32 %v136, %v136
    %v172 = vmul.f32 %v141, %v141
    %v173 = vmul.f32 %v144, %v144
    %v174 = vadd.f32 %v170, %v171
    %v175 = vadd.f32 %v174, %v172
    %v176 = vadd.f32 %v175, %v173
    %v177 = vrot.slane %v176, 4
    %v178 = vadd.f32 %v176, %v177
    %v179 = vrot.slane %v178, 2
    %v180 = vadd.f32 %v178, %v179
    %v181 = vrot.slane %v180, 1
    %v182 = vadd.f32 %v180, %v181
    %v183 = vadd.f32 %v169, %v182
    %184 = vst [vmem:[#allocation10] sm:$0x1] %v183
    // Predicated region
    $region22: #{tpu_custom_call.1} parent=1 // pred_check
      _
    $region23: #{tpu_custom_call.1} parent=1 // pred_check_branch
      %186 = sbr.rel (0) target = $region25
    $region24: #{tpu_custom_call.1} parent=1 // pred_region
      %s188 = ssub.s32 512, 512
      %189 = vsyncadd [#allocation4], %s188
      %s190 = sshll.u32 [#allocation7], 4
      %s191 = int_to_ptr.vmem [resolvable:$true] %s190
      %196 = dma.vmem_to_hbm [thread:$0]  %s191, 512, %s2, [#allocation4], 128, 128, 8
    $region25: #{tpu_custom_call.1} parent=1 // pred_fallthru
      _
    // Predicated region
    $region26: #{tpu_custom_call.1} parent=1 // pred_check
      _
    $region27: #{tpu_custom_call.1} parent=1 // pred_check_branch
      %198 = sbr.rel (0) target = $region29
    $region28: #{tpu_custom_call.1} parent=1 // pred_region
      %s200 = ssub.s32 16, 16
      %201 = vsyncadd [#allocation9], %s200
      %s203 = sshll.u32 [#allocation8], 4
      %s204 = int_to_ptr.vmem [resolvable:$true] %s203
      %206 = dma.vmem_to_hbm [thread:$0]  %s204, 16, %s3, [#allocation9]
    $region29: #{tpu_custom_call.1} parent=1 // pred_fallthru
      _
    // Predicated region
    $region30: #{tpu_custom_call.1} parent=1 // pred_check
      _
    $region31: #{tpu_custom_call.1} parent=1 // pred_check_branch
      %208 = sbr.rel (0) target = $region33
    $region32: #{tpu_custom_call.1} parent=1 // pred_region
      %s210 = ssub.s32 16, 16
      %211 = vsyncadd [#allocation9], %s210
      %s213 = sshll.u32 [#allocation10], 4
      %s214 = int_to_ptr.vmem [resolvable:$true] %s213
      %216 = dma.vmem_to_hbm [thread:$0]  %s214, 16, %s4, [#allocation9]
    $region33: #{tpu_custom_call.1} parent=1 // pred_fallthru
      _
    // Predicated region
    $region34: #{tpu_custom_call.1} parent=1 // pred_check
      _
    $region35: #{tpu_custom_call.1} parent=1 // pred_check_branch
      %218 = sbr.rel (0) target = $region37
    $region36: #{tpu_custom_call.1} parent=1 // pred_region
      %219 = dma.done [#allocation4], 512
    $region37: #{tpu_custom_call.1} parent=1 // pred_fallthru
      _
    // Predicated region
    $region38: #{tpu_custom_call.1} parent=1 // pred_check
      _
    $region39: #{tpu_custom_call.1} parent=1 // pred_check_branch
      %221 = sbr.rel (0) target = $region41
    $region40: #{tpu_custom_call.1} parent=1 // pred_region
      %222 = dma.done [#allocation9], 16
    $region41: #{tpu_custom_call.1} parent=1 // pred_fallthru
      _
    // Predicated region
    $region42: #{tpu_custom_call.1} parent=1 // pred_check
      _
    $region43: #{tpu_custom_call.1} parent=1 // pred_check_branch
      %224 = sbr.rel (0) target = $region45
    $region44: #{tpu_custom_call.1} parent=1 // pred_region
      %225 = dma.done [#allocation9], 16
    $region45: #{tpu_custom_call.1} parent=1 // pred_fallthru
      _
    %226 = vsyncpa [#allocation3], 1
    %227 = vsyncpa [#allocation6], 1
    %228 = vsyncpa [#allocation4], 1
    %229 = vsyncpa [#allocation9], 1

</llo_original>
